<compile_context>
chip_gen: v5e
topology: v5e:2x2
jax: 0.10.0
libtpu: 0.0.40
codegen_flags: <defaults>
</compile_context>

<pallas_src>
import math
import functools

import numpy as np
import jax
import jax.numpy as jnp
from jax import lax
from jax.experimental import pallas as pl
from jax.experimental.pallas import tpu as pltpu

GROUPS = 32            # nn.GroupNorm(32, in_channel)
EPS = 1e-5
LANE = 128
SUBLANE = 8


def _round_up(x, m):
    return (x + m - 1) // m * m


def _pick_tile(s, target):
    """Largest multiple-of-8 divisor of s that is <= target, else s (full)."""
    if s <= target:
        return s
    t = (target // SUBLANE) * SUBLANE
    while t >= SUBLANE:
        if s % t == 0:
            return t
        t -= SUBLANE
    return s          # no clean divisor: single full-extent tile (always legal)


def _vmem_limit_bytes():
    """~100 MiB scoped budget on 128 MiB parts (v5e/v6e); 48 MiB on v7x."""
    try:
        cap = pltpu.get_tpu_info().vmem_capacity_bytes
    except Exception:
        cap = None
    if cap is not None and cap >= 100 * 1024 * 1024:
        return 100 * 1024 * 1024
    return 48 * 1024 * 1024


# ---------------------------------------------------------------------------
# Kernel 1: GroupNorm statistics -> folded per-channel (scale, bias).
# grid = (B, S // ts); the s axis is an accumulation ("arbitrary") axis.
# ---------------------------------------------------------------------------
def _gn_stats_kernel(x_ref, gamma_ref, beta_ref, gmat_ref, gmatt_ref,
                     sb_ref, colsum_sc, colsq_sc, *, inv_count):
    si = pl.program_id(1)

    @pl.when(si == 0)
    def _init():
        colsum_sc[...] = jnp.zeros_like(colsum_sc)
        colsq_sc[...] = jnp.zeros_like(colsq_sc)

    x = x_ref[0]                                          # (ts, Cp) f32
    colsum_sc[...] += jnp.sum(x, axis=0, keepdims=True)
    colsq_sc[...] += jnp.sum(x * x, axis=0, keepdims=True)

    @pl.when(si == pl.num_programs(1) - 1)
    def _finalize():
        # Group sums via one-hot membership matmuls; padded channels have
        # all-zero membership rows so they do not pollute any group.
        gsum = jnp.dot(colsum_sc[...], gmat_ref[...],
                       preferred_element_type=jnp.float32)            # (1, G)
        gsumsq = jnp.dot(colsq_sc[...], gmat_ref[...],
                         preferred_element_type=jnp.float32)
        mean_g = gsum * inv_count          # precomputed reciprocal, no divide
        # E[x^2] - E[x]^2 in f32, clamped at 0 before rsqrt.
        # TODO(synk): switch to a two-pass/Welford variance if inputs with
        # |mean| >> std ever matter.
        var_g = jnp.maximum(gsumsq * inv_count - mean_g * mean_g, 0.0)
        mean_c = jnp.dot(mean_g, gmatt_ref[...],
                         preferred_element_type=jnp.float32)           # (1, Cp)
        var_c = jnp.dot(var_g, gmatt_ref[...],
                        preferred_element_type=jnp.float32)
        rstd_c = lax.rsqrt(var_c + EPS)
        scale_c = gamma_ref[...] * rstd_c                              # (1, Cp)
        bias_c = beta_ref[...] - mean_c * scale_c                      # (1, Cp)
        sb_ref[0] = jnp.concatenate([scale_c, bias_c], axis=0)         # (2, Cp)


# ---------------------------------------------------------------------------
# Kernel 2: GroupNorm apply (single FMA) + qkv 1x1 conv as a matmul.
# grid = (B, S // ts), both axes parallel; weights resident (constant maps).
# Outputs dense (B, S, C) q/k/v (no per-head lane padding).
# ---------------------------------------------------------------------------
def _qkv_kernel(x_ref, sb_ref, wqkv_ref, bqkv_ref, q_ref, k_ref, v_ref,
                *, C, compute_dtype):
    x = x_ref[0]                                          # (ts, Cp) f32
    sb = sb_ref[0]                                        # (2, Cp) f32
    norm = x * sb[0:1, :] + sb[1:2, :]                    # GroupNorm, f32
    qkv = jnp.dot(norm.astype(compute_dtype), wqkv_ref[...],
                  preferred_element_type=jnp.float32) + bqkv_ref[...]
    # columns: [q heads | k heads | v heads]; q was pre-scaled by 1/sqrt(C).
    q_ref[0] = qkv[:, :C].astype(compute_dtype)
    k_ref[0] = qkv[:, C:2 * C].astype(compute_dtype)
    v_ref[0] = qkv[:, 2 * C:].astype(compute_dtype)


# ---------------------------------------------------------------------------
# Kernel 3: per-head full-softmax attention with K/V resident for the whole
# sequence, concat heads, single out-projection matmul, + bias + residual,
# * 1/sqrt(2).  grid = (B, nQ), both axes parallel (megacore-friendly).
# ---------------------------------------------------------------------------
def _attention_kernel(q_ref, k_ref, v_ref, x_ref, wout_ref, bout_ref, o_ref,
                      *, n_head, head_dim, compute_dtype, exact_recip):
    head_outs = []
    for h in range(n_head):                               # static unroll
        lo = h * head_dim
        hi = lo + head_dim
        qh = q_ref[0, :, lo:hi]                           # (tq, Dh) pre-scaled
        kh = k_ref[0, :, lo:hi]                           # (S,  Dh)
        vh = v_ref[0, :, lo:hi]                           # (S,  Dh)
        # q @ k^T as a transposed contraction (no explicit k.T).
        s = lax.dot_general(qh, kh,
                            dimension_numbers=(((1,), (1,)), ((), ())),
                            preferred_element_type=jnp.float32)  # (tq, S) f32
        m = jnp.max(s, axis=-1, keepdims=True)
        p = jnp.exp(s - m)                                # one exp per score
        l = jnp.sum(p, axis=-1, keepdims=True)
        pv = jnp.dot(p.astype(compute_dtype), vh,
                     preferred_element_type=jnp.float32)  # (tq, Dh) f32
        if exact_recip:
            inv_l = 1.0 / l
        else:
            inv_l = pl.reciprocal(l, approx=True)         # EUP slot (~free)
        head_outs.append((pv * inv_l).astype(compute_dtype))
    cat = head_outs[0] if n_head == 1 else jnp.concatenate(head_outs, axis=1)
    # Single projection matmul with K = C (full MXU contraction fill).
    out = jnp.dot(cat, wout_ref[...], preferred_element_type=jnp.float32)
    o_ref[0] = ((out + bout_ref[...] + x_ref[0])
                * np.float32(1.0 / np.sqrt(2.0))).astype(o_ref.dtype)


# ---------------------------------------------------------------------------
# Parameter packing (plain-JAX glue, done once in the wrapper).
# ---------------------------------------------------------------------------
def _pack_qkv(w_qkv, b_qkv, C, Cp, n_head, Dh, compute_dtype):
    """(3C, C) conv weight -> (Cp, 3C): dense columns [q heads | k heads | v
    heads] in natural per-head channel order; q pre-scaled by 1/sqrt(C)."""
    q_scale = 1.0 / math.sqrt(C)
    w_cols, b_cols = [], []
    for kind in range(3):                     # 0=q, 1=k, 2=v
        for h in range(n_head):
            rows = slice(h * 3 * Dh + kind * Dh, h * 3 * Dh + (kind + 1) * Dh)
            w = w_qkv[rows, :].T              # (C, Dh)
            b = b_qkv[rows]                   # (Dh,)
            if kind == 0:
                w = w * q_scale
                b = b * q_scale
            w_cols.append(w)
            b_cols.append(b)
    w_mat = jnp.concatenate(w_cols, axis=1)                        # (C, 3C)
    w_mat = jnp.pad(w_mat, ((0, Cp - C), (0, 0))).astype(compute_dtype)
    b_vec = jnp.concatenate(b_cols).reshape(1, 3 * C).astype(jnp.float32)
    return w_mat, b_vec


def _pack_out(w_out, b_out, C, Cp, compute_dtype):
    """(C, C) conv weight -> (C, Cp): row = attention-output channel (head-
    major natural order), column = output channel (zero-padded to Cp lanes)."""
    w_mat = jnp.pad(w_out.T, ((0, 0), (0, Cp - C))).astype(compute_dtype)
    b_vec = jnp.pad(b_out, ((0, Cp - C),)).reshape(1, Cp).astype(jnp.float32)
    return w_mat, b_vec


# ---------------------------------------------------------------------------
# Wrapper
# ---------------------------------------------------------------------------
def self_attention_pallas(x_nchw, params, n_head,
                          compute_dtype=jnp.bfloat16,
                          block_q=128, block_s=512):
    B, C, H, W = x_nchw.shape
    S = H * W
    G = GROUPS
    assert C % G == 0 and C % n_head == 0
    Dh = C // n_head
    Cp = _round_up(C, LANE)           # lane-dense channel axis for f32 x / out

    ts = _pick_tile(S, block_s)       # GroupNorm / qkv tiles (mem-bound, big)
    n_s = S // ts
    tq = _pick_tile(S, block_q)       # attention Q tile
    n_q = S // tq
    # v7x megacore: make sure the ("parallel","parallel") grid exposes >= 2
    # units of work so both TensorCores are busy (no-op on v5e/v6e).
    if B * n_q < 2 and S > SUBLANE:
        tq_half = _pick_tile(S, max(SUBLANE, S // 2))
        if tq_half < S:
            tq, n_q = tq_half, S // tq_half

    vmem_limit = _vmem_limit_bytes()
    exact_recip = np.dtype(compute_dtype) == np.dtype(np.float32)

    # NCHW -> channels-last (B, S, Cp), zero-padded to a 128-lane multiple.
    x_seq = jnp.transpose(x_nchw, (0, 2, 3, 1)).reshape(B, S, C)
    x_pad = jnp.pad(x_seq, ((0, 0), (0, 0), (0, Cp - C)))

    gamma = jnp.pad(params['gamma'], ((0, Cp - C),)).reshape(1, Cp)
    beta = jnp.pad(params['beta'], ((0, Cp - C),)).reshape(1, Cp)
    # one-hot group membership (padded channels belong to no group)
    ch_group = jnp.arange(C, dtype=jnp.int32) // (C // G)
    gmat = (ch_group[:, None] == jnp.arange(G, dtype=jnp.int32)[None, :]
            ).astype(jnp.float32)
    gmat = jnp.pad(gmat, ((0, Cp - C), (0, 0)))            # (Cp, G)
    gmat_t = gmat.T                                        # (G, Cp)

    wqkv_mat, bqkv_vec = _pack_qkv(params['w_qkv'], params['b_qkv'],
                                   C, Cp, n_head, Dh, compute_dtype)
    wout_mat, bout_vec = _pack_out(params['w_out'], params['b_out'],
                                   C, Cp, compute_dtype)

    # ---- 1) GroupNorm statistics -> folded per-channel (scale, bias) -------
    sb = pl.pallas_call(
        functools.partial(_gn_stats_kernel,
                          inv_count=1.0 / float(S * (C // G))),
        out_shape=jax.ShapeDtypeStruct((B, 2, Cp), jnp.float32),
        grid_spec=pltpu.PrefetchScalarGridSpec(
            num_scalar_prefetch=0,
            grid=(B, n_s),
            in_specs=[
                pl.BlockSpec((1, ts, Cp), lambda b, s: (b, s, 0)),
                pl.BlockSpec((1, Cp), lambda b, s: (0, 0)),
                pl.BlockSpec((1, Cp), lambda b, s: (0, 0)),
                pl.BlockSpec((Cp, G), lambda b, s: (0, 0)),
                pl.BlockSpec((G, Cp), lambda b, s: (0, 0)),
            ],
            out_specs=pl.BlockSpec((1, 2, Cp), lambda b, s: (b, 0, 0)),
            scratch_shapes=[pltpu.VMEM((1, Cp), jnp.float32),
                            pltpu.VMEM((1, Cp), jnp.float32)],
        ),
        compiler_params=pltpu.CompilerParams(
            dimension_semantics=("parallel", "arbitrary"),
            vmem_limit_bytes=vmem_limit),
    )(x_pad, gamma, beta, gmat, gmat_t)

    # ---- 2) GroupNorm apply + qkv 1x1 conv (weights resident) --------------
    q, k, v = pl.pallas_call(
        functools.partial(_qkv_kernel, C=C, compute_dtype=compute_dtype),
        out_shape=(jax.ShapeDtypeStruct((B, S, C), compute_dtype),
                   jax.ShapeDtypeStruct((B, S, C), compute_dtype),
                   jax.ShapeDtypeStruct((B, S, C), compute_dtype)),
        grid_spec=pltpu.PrefetchScalarGridSpec(
            num_scalar_prefetch=0,
            grid=(B, n_s),
            in_specs=[
                pl.BlockSpec((1, ts, Cp), lambda b, s: (b, s, 0)),
                pl.BlockSpec((1, 2, Cp), lambda b, s: (b, 0, 0)),
                pl.BlockSpec((Cp, 3 * C), lambda b, s: (0, 0)),
                pl.BlockSpec((1, 3 * C), lambda b, s: (0, 0)),
            ],
            out_specs=[pl.BlockSpec((1, ts, C), lambda b, s: (b, s, 0)),
                       pl.BlockSpec((1, ts, C), lambda b, s: (b, s, 0)),
                       pl.BlockSpec((1, ts, C), lambda b, s: (b, s, 0))],
        ),
        compiler_params=pltpu.CompilerParams(
            dimension_semantics=("parallel", "parallel"),
            vmem_limit_bytes=vmem_limit),
    )(x_pad, sb, wqkv_mat, bqkv_vec)

    # ---- 3) attention (K/V resident per batch) + out-proj + residual -------
    out_pad = pl.pallas_call(
        functools.partial(_attention_kernel, n_head=n_head, head_dim=Dh,
                          compute_dtype=compute_dtype, exact_recip=exact_recip),
        out_shape=jax.ShapeDtypeStruct((B, S, Cp), jnp.float32),
        grid_spec=pltpu.PrefetchScalarGridSpec(
            num_scalar_prefetch=0,
            grid=(B, n_q),
            in_specs=[
                pl.BlockSpec((1, tq, C), lambda b, qi: (b, qi, 0)),   # q tile
                pl.BlockSpec((1, S, C), lambda b, qi: (b, 0, 0)),     # K (resident)
                pl.BlockSpec((1, S, C), lambda b, qi: (b, 0, 0)),     # V (resident)
                pl.BlockSpec((1, tq, Cp), lambda b, qi: (b, qi, 0)),  # residual
                pl.BlockSpec((C, Cp), lambda b, qi: (0, 0)),          # wout
                pl.BlockSpec((1, Cp), lambda b, qi: (0, 0)),          # bout
            ],
            out_specs=pl.BlockSpec((1, tq, Cp), lambda b, qi: (b, qi, 0)),
        ),
        compiler_params=pltpu.CompilerParams(
            dimension_semantics=("parallel", "parallel"),
            vmem_limit_bytes=vmem_limit),
    )(q, k, v, x_pad, wout_mat, bout_vec)

    out = out_pad[:, :, :C]
    return jnp.transpose(out.reshape(B, H, W, C), (0, 3, 1, 2))


# ---------------------------------------------------------------------------
# Synthetic parameters (variance_scaling init) and pure-JAX reference.
# ---------------------------------------------------------------------------
def init_params(key, C, n_head, out_scale=1e-10):
    """Matches the module's variance_scaling_init_ (fan_avg, uniform)."""
    del n_head
    k1, k2 = jax.random.split(key)
    bound_qkv = math.sqrt(3.0 * 1.0 / ((C + 3 * C) / 2.0))
    w_qkv = jax.random.uniform(k1, (3 * C, C), jnp.float32, -bound_qkv, bound_qkv)
    b_qkv = jnp.zeros((3 * C,), jnp.float32)
    bound_out = math.sqrt(3.0 * out_scale / ((C + C) / 2.0))
    w_out = jax.random.uniform(k2, (C, C), jnp.float32, -bound_out, bound_out)
    b_out = jnp.zeros((C,), jnp.float32)
    gamma = jnp.ones((C,), jnp.float32)
    beta = jnp.zeros((C,), jnp.float32)
    return dict(w_qkv=w_qkv, b_qkv=b_qkv, w_out=w_out, b_out=b_out,
                gamma=gamma, beta=beta)


def reference_forward(x, p, n_head):
    """Pure-JAX reference reproducing the PyTorch forward exactly (NCHW)."""
    B, C, H, W = x.shape
    G = GROUPS
    Dh = C // n_head
    xg = x.reshape(B, G, C // G, H, W)
    mean = xg.mean(axis=(2, 3, 4), keepdims=True)
    var = xg.var(axis=(2, 3, 4), keepdims=True)
    normg = (xg - mean) / jnp.sqrt(var + EPS)
    norm = (normg.reshape(B, C, H, W) * p['gamma'][None, :, None, None]
            + p['beta'][None, :, None, None])
    qkv = jnp.einsum('oc,bchw->bohw', p['w_qkv'], norm) + p['b_qkv'][None, :, None, None]
    qkv = qkv.reshape(B, n_head, 3 * Dh, H, W)
    q, k, v = qkv[:, :, :Dh], qkv[:, :, Dh:2 * Dh], qkv[:, :, 2 * Dh:]
    attn = jnp.einsum('bnchw,bncyx->bnhwyx', q, k) / math.sqrt(C)
    attn = attn.reshape(B, n_head, H, W, H * W)
    attn = jax.nn.softmax(attn, axis=-1)
    attn = attn.reshape(B, n_head, H, W, H, W)
    out = jnp.einsum('bnhwyx,bncyx->bnchw', attn, v).reshape(B, C, H, W)
    out = jnp.einsum('oc,bchw->bohw', p['w_out'], out) + p['b_out'][None, :, None, None]
    return (out + x) / np.sqrt(2.0)


if __name__ == "__main__":
    B, C, H, W = 2, 64, 8, 8          # C must be a multiple of 32 (GroupNorm)
    n_head = 2
    key = jax.random.PRNGKey(0)
    kx, kp = jax.random.split(key)
    x = jax.random.normal(kx, (B, C, H, W), dtype=jnp.float32)

    # The module's out-conv init scale is 1e-10, which makes the attention
    # branch numerically invisible in the output; use out_scale=1.0 here so
    # the check actually exercises GroupNorm + attention + projection.
    params = init_params(kp, C, n_head, out_scale=1.0)
    ref = reference_forward(x, params, n_head)

    # f32 MXU operands + exact softmax / exact reciprocal: tight check.
    out_f32 = jax.block_until_ready(
        self_attention_pallas(x, params, n_head, compute_dtype=jnp.float32))
    assert out_f32.shape == (B, C, H, W)
    assert bool(jnp.allclose(out_f32, ref, atol=5e-3, rtol=5e-3)), \
        float(jnp.max(jnp.abs(out_f32 - ref)))

    # bf16 MXU operands with f32 accumulation: production path on v6e/v7x.
    out_bf16 = jax.block_until_ready(
        self_attention_pallas(x, params, n_head, compute_dtype=jnp.bfloat16))
    assert out_bf16.shape == (B, C, H, W)
    assert bool(jnp.allclose(out_bf16, ref, atol=3e-2, rtol=3e-2)), \
        float(jnp.max(jnp.abs(out_bf16 - ref)))

    print("KERNEL_OK")
</pallas_src>

<mosaic_0001>
module attributes {stable_mosaic.version = 11 : i64} {
  func.func @_gn_stats_kernel(%arg0: i32, %arg1: i32, %arg2: memref<1x64x128xf32, #tpu.memory_space<vmem>>, %arg3: memref<1x128xf32, #tpu.memory_space<vmem>>, %arg4: memref<1x128xf32, #tpu.memory_space<vmem>>, %arg5: memref<128x32xf32, #tpu.memory_space<vmem>>, %arg6: memref<32x128xf32, #tpu.memory_space<vmem>>, %arg7: memref<1x2x128xf32, #tpu.memory_space<vmem>>, %arg8: memref<1x128xf32, #tpu.memory_space<vmem>>, %arg9: memref<1x128xf32, #tpu.memory_space<vmem>>) attributes {dimension_semantics = [#tpu.dimension_semantics<parallel>, #tpu.dimension_semantics<arbitrary>], iteration_bounds = array<i64: 2, 1>, scalar_prefetch = 0 : i64, scratch_operands = 2 : i64, tpu.core_type = #tpu.core_type<tc>, window_params = [{transform_indices = @transform_0, window_bounds = array<i64: 1, 64, 128>}, {pipeline_mode = #tpu.pipeline_mode<synchronous>, transform_indices = @transform_1, window_bounds = array<i64: 1, 128>}, {pipeline_mode = #tpu.pipeline_mode<synchronous>, transform_indices = @transform_2, window_bounds = array<i64: 1, 128>}, {pipeline_mode = #tpu.pipeline_mode<synchronous>, transform_indices = @transform_3, window_bounds = array<i64: 128, 32>}, {pipeline_mode = #tpu.pipeline_mode<synchronous>, transform_indices = @transform_4, window_bounds = array<i64: 32, 128>}, {transform_indices = @transform_5, window_bounds = array<i64: 1, 2, 128>}]} {
    %c0_i32 = arith.constant 0 : i32
    %0 = arith.cmpi eq, %arg1, %c0_i32 : i32
    %1 = arith.extui %0 : i1 to i32
    %c0_i32_0 = arith.constant 0 : i32
    %2 = arith.cmpi ne, %1, %c0_i32_0 : i32
    scf.if %2 {
      %cst_14 = arith.constant 0.000000e+00 : f32
      %19 = vector.broadcast %cst_14 : f32 to vector<1x128xf32>
      %c0_15 = arith.constant 0 : index
      %c0_16 = arith.constant 0 : index
      %20 = vector.load %arg8[%c0_15, %c0_16] : memref<1x128xf32, #tpu.memory_space<vmem>>, vector<1x128xf32>
      tpu.vector_store %arg8[%c0_15, %c0_16], %19 {strides = array<i32>} : memref<1x128xf32, #tpu.memory_space<vmem>>, vector<1x128xf32>,
      %cst_17 = arith.constant 0.000000e+00 : f32
      %21 = vector.broadcast %cst_17 : f32 to vector<1x128xf32>
      %c0_18 = arith.constant 0 : index
      %c0_19 = arith.constant 0 : index
      %22 = vector.load %arg9[%c0_18, %c0_19] : memref<1x128xf32, #tpu.memory_space<vmem>>, vector<1x128xf32>
      tpu.vector_store %arg9[%c0_18, %c0_19], %21 {strides = array<i32>} : memref<1x128xf32, #tpu.memory_space<vmem>>, vector<1x128xf32>,
    } else {
    }
    %c0 = arith.constant 0 : index
    %c0_1 = arith.constant 0 : index
    %c0_2 = arith.constant 0 : index
    %3 = vector.load %arg2[%c0, %c0_1, %c0_2] : memref<1x64x128xf32, #tpu.memory_space<vmem>>, vector<1x64x128xf32>
    %4 = vector.shape_cast %3 : vector<1x64x128xf32> to vector<64x128xf32>
    %c0_3 = arith.constant 0 : index
    %c0_4 = arith.constant 0 : index
    %5 = vector.load %arg8[%c0_3, %c0_4] : memref<1x128xf32, #tpu.memory_space<vmem>>, vector<1x128xf32>
    %cst = arith.constant dense<0.000000e+00> : vector<128xf32>
    %6 = vector.multi_reduction <add>, %4, %cst [0] : vector<64x128xf32> to vector<128xf32>
    %7 = vector.shape_cast %6 : vector<128xf32> to vector<1x128xf32>
    %8 = arith.addf %5, %7 : vector<1x128xf32>
    %c0_5 = arith.constant 0 : index
    %c0_6 = arith.constant 0 : index
    %9 = vector.load %arg8[%c0_5, %c0_6] : memref<1x128xf32, #tpu.memory_space<vmem>>, vector<1x128xf32>
    tpu.vector_store %arg8[%c0_5, %c0_6], %8 {strides = array<i32>} : memref<1x128xf32, #tpu.memory_space<vmem>>, vector<1x128xf32>,
    %c0_7 = arith.constant 0 : index
    %c0_8 = arith.constant 0 : index
    %10 = vector.load %arg9[%c0_7, %c0_8] : memref<1x128xf32, #tpu.memory_space<vmem>>, vector<1x128xf32>
    %11 = arith.mulf %4, %4 : vector<64x128xf32>
    %cst_9 = arith.constant dense<0.000000e+00> : vector<128xf32>
    %12 = vector.multi_reduction <add>, %11, %cst_9 [0] : vector<64x128xf32> to vector<128xf32>
    %13 = vector.shape_cast %12 : vector<128xf32> to vector<1x128xf32>
    %14 = arith.addf %10, %13 : vector<1x128xf32>
    %c0_10 = arith.constant 0 : index
    %c0_11 = arith.constant 0 : index
    %15 = vector.load %arg9[%c0_10, %c0_11] : memref<1x128xf32, #tpu.memory_space<vmem>>, vector<1x128xf32>
    tpu.vector_store %arg9[%c0_10, %c0_11], %14 {strides = array<i32>} : memref<1x128xf32, #tpu.memory_space<vmem>>, vector<1x128xf32>,
    %c0_i32_12 = arith.constant 0 : i32
    %16 = arith.cmpi eq, %arg1, %c0_i32_12 : i32
    %17 = arith.extui %16 : i1 to i32
    %c0_i32_13 = arith.constant 0 : i32
    %18 = arith.cmpi ne, %17, %c0_i32_13 : i32
    scf.if %18 {
      %c0_14 = arith.constant 0 : index
      %c0_15 = arith.constant 0 : index
      %19 = vector.load %arg8[%c0_14, %c0_15] : memref<1x128xf32, #tpu.memory_space<vmem>>, vector<1x128xf32>
      %c0_16 = arith.constant 0 : index
      %c0_17 = arith.constant 0 : index
      %20 = vector.load %arg5[%c0_16, %c0_17] : memref<128x32xf32, #tpu.memory_space<vmem>>, vector<128x32xf32>
      %cst_18 = arith.constant dense<0.000000e+00> : vector<1x32xf32>
      %21 = tpu.matmul %19, %20, %cst_18 {dimension_numbers = #tpu.dot_dimension_numbers<[1], [0], [0], [1], [0, 0, 1, 1], [], []>} : vector<1x128xf32>, vector<128x32xf32>, vector<1x32xf32> -> vector<1x32xf32>
      %c0_19 = arith.constant 0 : index
      %c0_20 = arith.constant 0 : index
      %22 = vector.load %arg9[%c0_19, %c0_20] : memref<1x128xf32, #tpu.memory_space<vmem>>, vector<1x128xf32>
      %c0_21 = arith.constant 0 : index
      %c0_22 = arith.constant 0 : index
      %23 = vector.load %arg5[%c0_21, %c0_22] : memref<128x32xf32, #tpu.memory_space<vmem>>, vector<128x32xf32>
      %cst_23 = arith.constant dense<0.000000e+00> : vector<1x32xf32>
      %24 = tpu.matmul %22, %23, %cst_23 {dimension_numbers = #tpu.dot_dimension_numbers<[1], [0], [0], [1], [0, 0, 1, 1], [], []>} : vector<1x128xf32>, vector<128x32xf32>, vector<1x32xf32> -> vector<1x32xf32>
      %cst_24 = arith.constant 7.812500e-03 : f32
      %25 = vector.broadcast %cst_24 : f32 to vector<1x32xf32>
      %26 = arith.mulf %21, %25 : vector<1x32xf32>
      %cst_25 = arith.constant 7.812500e-03 : f32
      %27 = vector.broadcast %cst_25 : f32 to vector<1x32xf32>
      %28 = arith.mulf %24, %27 : vector<1x32xf32>
      %29 = arith.mulf %26, %26 : vector<1x32xf32>
      %30 = arith.subf %28, %29 : vector<1x32xf32>
      %cst_26 = arith.constant 0.000000e+00 : f32
      %31 = vector.broadcast %cst_26 : f32 to vector<1x32xf32>
      %32 = arith.maximumf %30, %31 : vector<1x32xf32>
      %c0_27 = arith.constant 0 : index
      %c0_28 = arith.constant 0 : index
      %33 = vector.load %arg6[%c0_27, %c0_28] : memref<32x128xf32, #tpu.memory_space<vmem>>, vector<32x128xf32>
      %cst_29 = arith.constant dense<0.000000e+00> : vector<1x128xf32>
      %34 = tpu.matmul %26, %33, %cst_29 {dimension_numbers = #tpu.dot_dimension_numbers<[1], [0], [0], [1], [0, 0, 1, 1], [], []>} : vector<1x32xf32>, vector<32x128xf32>, vector<1x128xf32> -> vector<1x128xf32>
      %c0_30 = arith.constant 0 : index
      %c0_31 = arith.constant 0 : index
      %35 = vector.load %arg6[%c0_30, %c0_31] : memref<32x128xf32, #tpu.memory_space<vmem>>, vector<32x128xf32>
      %cst_32 = arith.constant dense<0.000000e+00> : vector<1x128xf32>
      %36 = tpu.matmul %32, %35, %cst_32 {dimension_numbers = #tpu.dot_dimension_numbers<[1], [0], [0], [1], [0, 0, 1, 1], [], []>} : vector<1x32xf32>, vector<32x128xf32>, vector<1x128xf32> -> vector<1x128xf32>
      %cst_33 = arith.constant 9.99999974E-6 : f32
      %37 = vector.broadcast %cst_33 : f32 to vector<1x128xf32>
      %38 = arith.addf %36, %37 : vector<1x128xf32>
      %39 = math.rsqrt %38 : vector<1x128xf32>
      %c0_34 = arith.constant 0 : index
      %c0_35 = arith.constant 0 : index
      %40 = vector.load %arg3[%c0_34, %c0_35] : memref<1x128xf32, #tpu.memory_space<vmem>>, vector<1x128xf32>
      %41 = arith.mulf %40, %39 : vector<1x128xf32>
      %c0_36 = arith.constant 0 : index
      %c0_37 = arith.constant 0 : index
      %42 = vector.load %arg4[%c0_36, %c0_37] : memref<1x128xf32, #tpu.memory_space<vmem>>, vector<1x128xf32>
      %43 = arith.mulf %34, %41 : vector<1x128xf32>
      %44 = arith.subf %42, %43 : vector<1x128xf32>
      %45 = tpu.concatenate %41, %44 in 0 : vector<1x128xf32>, vector<1x128xf32> -> vector<2x128xf32>
      %c0_38 = arith.constant 0 : index
      %c0_39 = arith.constant 0 : index
      %c0_40 = arith.constant 0 : index
      %46 = vector.load %arg7[%c0_38, %c0_39, %c0_40] : memref<1x2x128xf32, #tpu.memory_space<vmem>>, vector<1x2x128xf32>
      %47 = vector.shape_cast %46 : vector<1x2x128xf32> to vector<2x128xf32>
      %48 = vector.shape_cast %45 : vector<2x128xf32> to vector<1x2x128xf32>
      tpu.vector_store %arg7[%c0_38, %c0_39, %c0_40], %48 {strides = array<i32>} : memref<1x2x128xf32, #tpu.memory_space<vmem>>, vector<1x2x128xf32>,
    } else {
    }
    return
  }
  func.func @transform_0(%arg0: i32, %arg1: i32) -> (i32, i32, i32) {
    %c0_i32 = arith.constant 0 : i32
    %c0_i32_0 = arith.constant 0 : i32
    return %arg0, %arg1, %c0_i32 : i32, i32, i32
  }
  func.func @transform_1(%arg0: i32, %arg1: i32) -> (i32, i32) {
    %c0_i32 = arith.constant 0 : i32
    %c0_i32_0 = arith.constant 0 : i32
    %c0_i32_1 = arith.constant 0 : i32
    return %c0_i32, %c0_i32_0 : i32, i32
  }
  func.func @transform_2(%arg0: i32, %arg1: i32) -> (i32, i32) {
    %c0_i32 = arith.constant 0 : i32
    %c0_i32_0 = arith.constant 0 : i32
    %c0_i32_1 = arith.constant 0 : i32
    return %c0_i32, %c0_i32_0 : i32, i32
  }
  func.func @transform_3(%arg0: i32, %arg1: i32) -> (i32, i32) {
    %c0_i32 = arith.constant 0 : i32
    %c0_i32_0 = arith.constant 0 : i32
    %c0_i32_1 = arith.constant 0 : i32
    return %c0_i32, %c0_i32_0 : i32, i32
  }
  func.func @transform_4(%arg0: i32, %arg1: i32) -> (i32, i32) {
    %c0_i32 = arith.constant 0 : i32
    %c0_i32_0 = arith.constant 0 : i32
    %c0_i32_1 = arith.constant 0 : i32
    return %c0_i32, %c0_i32_0 : i32, i32
  }
  func.func @transform_5(%arg0: i32, %arg1: i32) -> (i32, i32, i32) {
    %c0_i32 = arith.constant 0 : i32
    %c0_i32_0 = arith.constant 0 : i32
    %c0_i32_1 = arith.constant 0 : i32
    return %arg0, %c0_i32, %c0_i32_0 : i32, i32, i32
  }
}

</mosaic_0001>

<llo_original>
// kernel: tpu_custom_call.1
$region0: #{tpu_custom_call.1}
  #allocation0 [shape = 'u32[]', space=smem, size = 0x4, offset = 0x4, fixed_abs, tag = 'smem constant byte address 0x4 - core index']
  #allocation1 [shape = 'u32[72,128]{1,0:T(1,128)}', space=vmem, size = 0x9000, scoped, tag = 'internal scratch']
  #allocation2 [shape = 'f32[1,128]{1,0:T(1,128)}', space=vmem, size = 0x200, scoped, tag = 'scratch operand']
  #allocation3 [shape = 'f32[1,128]{1,0:T(1,128)}', space=vmem, size = 0x200, scoped, tag = 'scratch operand']
  %s0 = inlined_call_operand.vmem [shape: f32[2,64,128], index: 0, kind: input, shape index: {}]
  %s1 = inlined_call_operand.hbm [shape: f32[1,128], index: 1, kind: input, shape index: {}]
  %s2 = inlined_call_operand.vmem [shape: f32[1,128], index: 2, kind: input, shape index: {}]
  %s3 = inlined_call_operand.vmem [shape: f32[128,32], index: 3, kind: input, shape index: {}]
  %s4 = inlined_call_operand.vmem [shape: f32[32,128], index: 4, kind: input, shape index: {}]
  %s5 = inlined_call_operand.hbm [shape: f32[2,2,128], index: 5, kind: output, shape index: {}]
  %s6 = sld [smem:[#allocation0]]
  $region65: #{tpu_custom_call.1} parent=0
    _
  %s8 = ssub.s32 1, %s6
  %s9 = scalar_select 0, %s8, %s6
  $region1: #{tpu_custom_call.1} parent=0
    #allocation4 [shape = 'u8[512]{0}', space=vmem, size = 0x400, scoped, tag = 'input window, operand 1, single buffered']
    #allocation5 [shape = 's32[2]{0}', space=sflag, size = 0x8, scoped, tag = 'scoped memory for tpu_custom_call.1']
    #allocation6 [shape = 's32[2]{0}', space=sflag, size = 0x8, scoped, tag = 'scoped memory for tpu_custom_call.1']
    #allocation7 [shape = 'u8[2048]{0}', space=vmem, size = 0x800, scoped, tag = 'output window, operand 0']
    %10 = vsyncpa [#allocation5], 0
    %11 = vsyncpa [#allocation6], 0
    %s12 = scalar_lea.sflag [#allocation6], 1
    %13 = vsyncpa %s12, 0
    loop: start=0, step=1, limit=4
    $region2: #{tpu_custom_call.1} parent=1 // loop_pre_header
      _
    $region3: #{tpu_custom_call.1} parent=1 // loop_header
      %s15 = sphi 0, %s19
      %p16 = scmp.ge.s32.totalorder %s15, 4
      %s22 = sphi 0, %s34
      %s23 = sphi 0, %s30
      %s24 = sphi 0, %s22
      %s25 = sphi 0, %s23
      %s26 = sphi 0, %s24
      %s27 = sphi 0, %s25
      %s39 = sphi 0, %s41
      %s42 = sphi 0, %s39
      %s43 = sphi 0, %s42
      %s59 = sphi 0, %s43
      %s63 = sphi 0, %s63
      %s65 = sphi 0, %s63
      %s66 = sphi 0, %s65
      %s80 = sphi 0, %s66
      %s84 = sphi 0, %s84
      %s86 = sphi 0, %s84
      %s87 = sphi 0, %s86
      %s101 = sphi 0, %s87
      %s105 = sphi 0, %s105
      %s107 = sphi 0, %s105
      %s108 = sphi 0, %s107
      %s122 = sphi 0, %s108
      %s126 = sphi 0, %s126
      %s128 = sphi 0, %s126
      %s129 = sphi 0, %s128
      %s143 = sphi 0, %s129
      %s149 = sphi 0, %s151
      %s152 = sphi 0, %s149
      %s153 = sphi 0, %s152
      %s169 = sphi 0, %s153
    $region4: #{tpu_custom_call.1} parent=1 // loop_header_branch
      %18 = sbr.rel (%p16) target = $region8
    $region5: #{tpu_custom_call.1} parent=1 // loop_body
      %s20 = ssub.s32 %s15, 1
      %s21 = ssub.s32 %s15, 2
      %s28 = sadd.s32 1, %s23
      %p29 = scmp.ge.s32.totalorder %s28, 1
      %s30 = scalar_select %p29, 0, %s28
      %s31 = sadd.s32 1, %s22
      %s32 = scalar_select %p29, %s31, %s22
      %p33 = scmp.ge.s32.totalorder %s32, 2
      %s34 = scalar_select %p33, 0, %s32
      %s35 = ssub.s32 %s22, %s34
      %s36 = ssub.s32 %s23, %s30
      %s37 = sor.u32 %s35, %s36
      %p38 = scmp.eq.s32.totalorder %s37, 0
      %s40 = sadd.s32 %s39, 1
      %s41 = scalar_select %p38, %s39, %s40
      %p44 = pneg %p38
      %p45 = scmp.eq.s32.totalorder %s15, 1
      %p46 = por %p44, %p45
      %p47 = scmp.ne.s32.totalorder %s39, %s42
      %p48 = scmp.eq.s32.totalorder %s15, 0
      %p49 = por %p47, %p48
      %p50 = scmp.ne.s32.totalorder %s39, %s42
      %p51 = scmp.eq.s32.totalorder %s20, 1
      %p52 = por %p50, %p51
      %p53 = scmp.ne.s32.totalorder %s42, %s43
      %p54 = scmp.eq.s32.totalorder %s20, 0
      %p55 = por %p53, %p54
      %p56 = scmp.ne.s32.totalorder %s42, %s43
      %p57 = scmp.eq.s32.totalorder %s21, 1
      %p58 = por %p56, %p57
      %p60 = scmp.ne.s32.totalorder %s43, %s59
      %p61 = scmp.eq.s32.totalorder %s21, 0
      %p62 = por %p60, %p61
      %s64 = sadd.s32 %s63, 1
      %p67 = scmp.eq.s32.totalorder %s15, 1
      %p68 = scmp.ne.s32.totalorder %s63, %s65
      %p69 = scmp.eq.s32.totalorder %s15, 0
      %p70 = por %p68, %p69
      %p71 = scmp.ne.s32.totalorder %s63, %s65
      %p72 = scmp.eq.s32.totalorder %s20, 1
      %p73 = por %p71, %p72
      %p74 = scmp.ne.s32.totalorder %s65, %s66
      %p75 = scmp.eq.s32.totalorder %s20, 0
      %p76 = por %p74, %p75
      %p77 = scmp.ne.s32.totalorder %s65, %s66
      %p78 = scmp.eq.s32.totalorder %s21, 1
      %p79 = por %p77, %p78
      %p81 = scmp.ne.s32.totalorder %s66, %s80
      %p82 = scmp.eq.s32.totalorder %s21, 0
      %p83 = por %p81, %p82
      %s85 = sadd.s32 %s84, 1
      %p88 = scmp.eq.s32.totalorder %s15, 1
      %p89 = scmp.ne.s32.totalorder %s84, %s86
      %p90 = scmp.eq.s32.totalorder %s15, 0
      %p91 = por %p89, %p90
      %p92 = scmp.ne.s32.totalorder %s84, %s86
      %p93 = scmp.eq.s32.totalorder %s20, 1
      %p94 = por %p92, %p93
      %p95 = scmp.ne.s32.totalorder %s86, %s87
      %p96 = scmp.eq.s32.totalorder %s20, 0
      %p97 = por %p95, %p96
      %p98 = scmp.ne.s32.totalorder %s86, %s87
      %p99 = scmp.eq.s32.totalorder %s21, 1
      %p100 = por %p98, %p99
      %p102 = scmp.ne.s32.totalorder %s87, %s101
      %p103 = scmp.eq.s32.totalorder %s21, 0
      %p104 = por %p102, %p103
      %s106 = sadd.s32 %s105, 1
      %p109 = scmp.eq.s32.totalorder %s15, 1
      %p110 = scmp.ne.s32.totalorder %s105, %s107
      %p111 = scmp.eq.s32.totalorder %s15, 0
      %p112 = por %p110, %p111
      %p113 = scmp.ne.s32.totalorder %s105, %s107
      %p114 = scmp.eq.s32.totalorder %s20, 1
      %p115 = por %p113, %p114
      %p116 = scmp.ne.s32.totalorder %s107, %s108
      %p117 = scmp.eq.s32.totalorder %s20, 0
      %p118 = por %p116, %p117
      %p119 = scmp.ne.s32.totalorder %s107, %s108
      %p120 = scmp.eq.s32.totalorder %s21, 1
      %p121 = por %p119, %p120
      %p123 = scmp.ne.s32.totalorder %s108, %s122
      %p124 = scmp.eq.s32.totalorder %s21, 0
      %p125 = por %p123, %p124
      %s127 = sadd.s32 %s126, 1
      %p130 = scmp.eq.s32.totalorder %s15, 1
      %p131 = scmp.ne.s32.totalorder %s126, %s128
      %p132 = scmp.eq.s32.totalorder %s15, 0
      %p133 = por %p131, %p132
      %p134 = scmp.ne.s32.totalorder %s126, %s128
      %p135 = scmp.eq.s32.totalorder %s20, 1
      %p136 = por %p134, %p135
      %p137 = scmp.ne.s32.totalorder %s128, %s129
      %p138 = scmp.eq.s32.totalorder %s20, 0
      %p139 = por %p137, %p138
      %p140 = scmp.ne.s32.totalorder %s128, %s129
      %p141 = scmp.eq.s32.totalorder %s21, 1
      %p142 = por %p140, %p141
      %p144 = scmp.ne.s32.totalorder %s129, %s143
      %p145 = scmp.eq.s32.totalorder %s21, 0
      %p146 = por %p144, %p145
      %s147 = ssub.s32 %s22, %s34
      %p148 = scmp.eq.s32.totalorder %s147, 0
      %s150 = sadd.s32 %s149, 1
      %s151 = scalar_select %p148, %s149, %s150
      %p154 = pneg %p148
      %p155 = scmp.eq.s32.totalorder %s15, 1
      %p156 = por %p154, %p155
      %p157 = scmp.ne.s32.totalorder %s149, %s152
      %p158 = scmp.eq.s32.totalorder %s15, 0
      %p159 = por %p157, %p158
      %p160 = scmp.ne.s32.totalorder %s149, %s152
      %p161 = scmp.eq.s32.totalorder %s20, 1
      %p162 = por %p160, %p161
      %p163 = scmp.ne.s32.totalorder %s152, %s153
      %p164 = scmp.eq.s32.totalorder %s20, 0
      %p165 = por %p163, %p164
      %p166 = scmp.ne.s32.totalorder %s152, %s153
      %p167 = scmp.eq.s32.totalorder %s21, 1
      %p168 = por %p166, %p167
      %p170 = scmp.ne.s32.totalorder %s153, %s169
      %p171 = scmp.eq.s32.totalorder %s21, 0
      %p172 = por %p170, %p171
      %p173 = scmp.le.s32.totalorder 1, %s15
      %p174 = scmp.lt.s32.totalorder %s15, 3
      %p175 = pnand %p173, %p174
      %p176 = pneg %p175
      // Predicated region
      $region9: #{tpu_custom_call.1} parent=5 // pred_check
        _
      $region10: #{tpu_custom_call.1} parent=5 // pred_check_branch
        %178 = sbr.rel (%p175) target = $region12
      $region11: #{tpu_custom_call.1} parent=5 // pred_region
        %s179 = ssub.s32 %s15, 1
        // Predicated region
        $region13: #{tpu_custom_call.1} parent=11 // pred_check
          %p180 = pneg %p76
        $region14: #{tpu_custom_call.1} parent=11 // pred_check_branch
          %182 = sbr.rel (%p180) target = $region16
        $region15: #{tpu_custom_call.1} parent=11 // pred_region
          %184 = vsyncadd [#allocation5], 0
          %s186 = sshll.u32 %s1, 4
          %s187 = int_to_ptr.hbm [resolvable:$true] %s186
          %s188 = sshll.u32 [#allocation4], 4
          %s189 = int_to_ptr.vmem [resolvable:$true] %s188
          %191 = dma.hbm_to_vmem [thread:$0]  %s187, 16, %s189, [#allocation5]
        $region16: #{tpu_custom_call.1} parent=11 // pred_fallthru
          _
        // Predicated region
        $region17: #{tpu_custom_call.1} parent=11 // pred_check
          %p192 = pneg %p97
        $region18: #{tpu_custom_call.1} parent=11 // pred_check_branch
          %194 = sbr.rel (%p192) target = $region20
        $region19: #{tpu_custom_call.1} parent=11 // pred_region
          _
        $region20: #{tpu_custom_call.1} parent=11 // pred_fallthru
          _
        // Predicated region
        $region21: #{tpu_custom_call.1} parent=11 // pred_check
          %p195 = pneg %p118
        $region22: #{tpu_custom_call.1} parent=11 // pred_check_branch
          %197 = sbr.rel (%p195) target = $region24
        $region23: #{tpu_custom_call.1} parent=11 // pred_region
          _
        $region24: #{tpu_custom_call.1} parent=11 // pred_fallthru
          _
        // Predicated region
        $region25: #{tpu_custom_call.1} parent=11 // pred_check
          %p198 = pneg %p139
        $region26: #{tpu_custom_call.1} parent=11 // pred_check_branch
          %200 = sbr.rel (%p198) target = $region28
        $region27: #{tpu_custom_call.1} parent=11 // pred_region
          _
        $region28: #{tpu_custom_call.1} parent=11 // pred_fallthru
          _
      $region12: #{tpu_custom_call.1} parent=5 // pred_fallthru
        _
      %p201 = scmp.lt.s32.totalorder %s15, 2
      // Predicated region
      $region29: #{tpu_custom_call.1} parent=5 // pred_check
        %p202 = pneg %p201
      $region30: #{tpu_custom_call.1} parent=5 // pred_check_branch
        %204 = sbr.rel (%p202) target = $region32
      $region31: #{tpu_custom_call.1} parent=5 // pred_region
        // Predicated region
        $region33: #{tpu_custom_call.1} parent=31 // pred_check
          %p205 = pneg %p49
        $region34: #{tpu_custom_call.1} parent=31 // pred_check_branch
          %207 = sbr.rel (%p205) target = $region36
        $region35: #{tpu_custom_call.1} parent=31 // pred_region
          %s208 = smul.u32 8, %s23
          %p209 = scmp.lt.s32.totalorder %s22, 1
          %s210 = scalar_select %p209, %s22, 1
          %p211 = scmp.lt.s32.totalorder %s208, 7
          %s212 = scalar_select %p211, %s208, 7
          %s213 = smul.addr %s210, 8
          %s214 = sadd.s32 %s212, %s213
          %s215 = smul.addr %s214, 8
          %s216 = scalar_lea.vmem %s0, %s215
          %s217 = smul.u32 8, %s23
        $region36: #{tpu_custom_call.1} parent=31 // pred_fallthru
          _
      $region32: #{tpu_custom_call.1} parent=5 // pred_fallthru
        _
      %p218 = scmp.le.s32.totalorder 1, %s15
      %p219 = scmp.lt.s32.totalorder %s15, 3
      %p220 = pnand %p218, %p219
      %p221 = pneg %p220
      // Predicated region
      $region37: #{tpu_custom_call.1} parent=5 // pred_check
        _
      $region38: #{tpu_custom_call.1} parent=5 // pred_check_branch
        %223 = sbr.rel (%p220) target = $region40
      $region39: #{tpu_custom_call.1} parent=5 // pred_region
        %s224 = ssub.s32 %s15, 1
        // Predicated region
        $region41: #{tpu_custom_call.1} parent=39 // pred_check
          %p225 = pneg %p76
        $region42: #{tpu_custom_call.1} parent=39 // pred_check_branch
          %227 = sbr.rel (%p225) target = $region44
        $region43: #{tpu_custom_call.1} parent=39 // pred_region
          %229 = dma.done [#allocation5], 16
        $region44: #{tpu_custom_call.1} parent=39 // pred_fallthru
          _
        %s230 = smul.u32 8, %s25
        %p231 = scmp.lt.s32.totalorder %s24, 1
        %s232 = scalar_select %p231, %s24, 1
        %p233 = scmp.lt.s32.totalorder %s230, 7
        %s234 = scalar_select %p233, %s230, 7
        %s235 = smul.addr %s232, 8
        %s236 = sadd.s32 %s234, %s235
        %s237 = smul.addr %s236, 8
        %s238 = scalar_lea.vmem %s0, %s237
        %p239 = pneg %p55
        %p240 = pneg %p52
        %p241 = pneg %p76
        %p242 = pneg %p73
        %p243 = pneg %p97
        %p244 = pneg %p94
        %p245 = pneg %p118
        %p246 = pneg %p115
        %p247 = pneg %p139
        %p248 = pneg %p136
        %p249 = pneg %p165
        %p250 = pneg %p162
        %s251 = sand.u32 %s152, 1
        %s252 = scalar_lea.sflag [#allocation6], %s251
        %s253 = sand.u32 %s152, 1
        %s254 = smul.addr %s253, 2
        %s255 = scalar_lea.vmem [#allocation7], %s254
        %s256 = smul.u32 8, %s25
        %p257 = scmp.lt.s32.totalorder %s24, 1
        %s258 = scalar_select %p257, %s24, 1
        %p259 = scmp.lt.s32.totalorder %s256, 7
        %s260 = scalar_select %p259, %s256, 7
        %s261 = smul.addr %s258, 8
        %s262 = sadd.s32 %s260, %s261
        %s263 = smul.addr %s262, 8
        %s264 = scalar_lea.vmem %s0, %s263
        %s265 = smul.u32 8, %s25
        %p266 = scmp.eq.s32.totalorder %s25, 0
        // Predicated region
        $region45: #{tpu_custom_call.1} parent=39 // pred_check
          %p267 = pneg %p266
        $region46: #{tpu_custom_call.1} parent=39 // pred_check_branch
          %269 = sbr.rel (%p267) target = $region48
        $region47: #{tpu_custom_call.1} parent=39 // pred_region
          %270 = vst [vmem:[#allocation2] sm:$0x1] 0.0
          %271 = vst [vmem:[#allocation3] sm:$0x1] 0.0
        $region48: #{tpu_custom_call.1} parent=39 // pred_fallthru
          _
        %v272 = vld [vmem:[%s264] sm:$0xff]
        %v273 = vld [vmem:[%s264 + $0x8] sm:$0xff]
        %v274 = vld [vmem:[%s264 + $0x10] sm:$0xff]
        %v275 = vld [vmem:[%s264 + $0x18] sm:$0xff]
        %v276 = vld [vmem:[%s264 + $0x20] sm:$0xff]
        %v277 = vld [vmem:[%s264 + $0x28] sm:$0xff]
        %v278 = vld [vmem:[%s264 + $0x30] sm:$0xff]
        %v279 = vld [vmem:[%s264 + $0x38] sm:$0xff]
        %v280 = vld [vmem:[#allocation2] sm:$0x1]
        %v281 = vadd.f32 %v272, %v273
        %v282 = vadd.f32 %v281, %v274
        %v283 = vadd.f32 %v282, %v275
        %v284 = vadd.f32 %v283, %v276
        %v285 = vadd.f32 %v284, %v277
        %v286 = vadd.f32 %v285, %v278
        %v287 = vadd.f32 %v286, %v279
        %v288 = vrot.slane %v287, 4
        %v289 = vadd.f32 %v287, %v288
        %v290 = vrot.slane %v289, 2
        %v291 = vadd.f32 %v289, %v290
        %v292 = vrot.slane %v291, 1
        %v293 = vadd.f32 %v291, %v292
        %v294 = vadd.f32 %v280, %v293
        %295 = vst [vmem:[#allocation2] sm:$0x1] %v294
        %v296 = vld [vmem:[#allocation3] sm:$0x1]
        %v297 = vmul.f32 %v272, %v272
        %v298 = vmul.f32 %v273, %v273
        %v299 = vmul.f32 %v274, %v274
        %v300 = vmul.f32 %v275, %v275
        %v301 = vmul.f32 %v276, %v276
        %v302 = vmul.f32 %v277, %v277
        %v303 = vmul.f32 %v278, %v278
        %v304 = vmul.f32 %v279, %v279
        %v305 = vadd.f32 %v297, %v298
        %v306 = vadd.f32 %v305, %v299
        %v307 = vadd.f32 %v306, %v300
        %v308 = vadd.f32 %v307, %v301
        %v309 = vadd.f32 %v308, %v302
        %v310 = vadd.f32 %v309, %v303
        %v311 = vadd.f32 %v310, %v304
        %v312 = vrot.slane %v311, 4
        %v313 = vadd.f32 %v311, %v312
        %v314 = vrot.slane %v313, 2
        %v315 = vadd.f32 %v313, %v314
        %v316 = vrot.slane %v315, 1
        %v317 = vadd.f32 %v315, %v316
        %v318 = vadd.f32 %v296, %v317
        %319 = vst [vmem:[#allocation3] sm:$0x1] %v318
        // Predicated region
        $region49: #{tpu_custom_call.1} parent=39 // pred_check
          %p320 = pneg %p266
        $region50: #{tpu_custom_call.1} parent=39 // pred_check_branch
          %322 = sbr.rel (%p320) target = $region52
        $region51: #{tpu_custom_call.1} parent=39 // pred_region
          %v323 = vld [vmem:[#allocation2] sm:$0x1]
          %v324 = vld [vmem:[%s3] sm:$0xff]
          %v325 = vld [vmem:[%s3 + $0x8] sm:$0xff]
          %v326 = vld [vmem:[%s3 + $0x10] sm:$0xff]
          %v327 = vld [vmem:[%s3 + $0x18] sm:$0xff]
          %v328 = vld [vmem:[%s3 + $0x20] sm:$0xff]
          %v329 = vld [vmem:[%s3 + $0x28] sm:$0xff]
          %v330 = vld [vmem:[%s3 + $0x30] sm:$0xff]
          %v331 = vld [vmem:[%s3 + $0x38] sm:$0xff]
          %v332 = vld [vmem:[%s3 + $0x40] sm:$0xff]
          %v333 = vld [vmem:[%s3 + $0x48] sm:$0xff]
          %v334 = vld [vmem:[%s3 + $0x50] sm:$0xff]
          %v335 = vld [vmem:[%s3 + $0x58] sm:$0xff]
          %v336 = vld [vmem:[%s3 + $0x60] sm:$0xff]
          %v337 = vld [vmem:[%s3 + $0x68] sm:$0xff]
          %v338 = vld [vmem:[%s3 + $0x70] sm:$0xff]
          %v339 = vld [vmem:[%s3 + $0x78] sm:$0xff]
          %340 = vmatpush.msra.mxu0 %v339
          %341 = vmatpush.msra.mxu0 %v338
          %342 = vmatpush.msra.mxu0 %v337
          %343 = vmatpush.msra.mxu0 %v336
          %344 = vmatpush.msra.mxu0 %v335
          %345 = vmatpush.msra.mxu0 %v334
          %346 = vmatpush.msra.mxu0 %v333
          %347 = vmatpush.msra.mxu0 %v332
          %348 = vmatpush.msra.mxu0 %v331
          %349 = vmatpush.msra.mxu0 %v330
          %350 = vmatpush.msra.mxu0 %v329
          %351 = vmatpush.msra.mxu0 %v328
          %352 = vmatpush.msra.mxu0 %v327
          %353 = vmatpush.msra.mxu0 %v326
          %354 = vmatpush.msra.mxu0 %v325
          %355 = vmatpush.msra.mxu0 %v324
          %356 = vmatmul.f32.gmra.mxu0 %v323
          %v357 = vpop.f32.mrf.mxu0
          %v358 = vadd.f32 0.0, %v357
          %359 = vdwg.mxu0
          %v360 = vld [vmem:[#allocation3] sm:$0x1]
          %361 = vmatpush.msra.mxu0 %v339
          %362 = vmatpush.msra.mxu0 %v338
          %363 = vmatpush.msra.mxu0 %v337
          %364 = vmatpush.msra.mxu0 %v336
          %365 = vmatpush.msra.mxu0 %v335
          %366 = vmatpush.msra.mxu0 %v334
          %367 = vmatpush.msra.mxu0 %v333
          %368 = vmatpush.msra.mxu0 %v332
          %369 = vmatpush.msra.mxu0 %v331
          %370 = vmatpush.msra.mxu0 %v330
          %371 = vmatpush.msra.mxu0 %v329
          %372 = vmatpush.msra.mxu0 %v328
          %373 = vmatpush.msra.mxu0 %v327
          %374 = vmatpush.msra.mxu0 %v326
          %375 = vmatpush.msra.mxu0 %v325
          %376 = vmatpush.msra.mxu0 %v324
          %377 = vmatmul.f32.gmra.mxu0 %v360
          %v378 = vpop.f32.mrf.mxu0
          %v379 = vadd.f32 0.0, %v378
          %380 = vdwg.mxu0
          %v381 = vmul.f32 %v358, 0.0078125
          %v382 = vmul.f32 %v379, 0.0078125
          %v383 = vmul.f32 %v381, %v381
          %v384 = vsub.f32 %v382, %v383
          %v385 = vmax.f32 %v384, 0.0
          %v386 = vld [vmem:[%s4] sm:$0xff]
          %v387 = vld [vmem:[%s4 + $0x8] sm:$0xff]
          %v388 = vld [vmem:[%s4 + $0x10] sm:$0xff]
          %v389 = vld [vmem:[%s4 + $0x18] sm:$0xff]
          %vm390 = vcmask 261120
          %v392 = vsel %vm390, %v381, 0
          %394 = vmatpush.msra.mxu0 0.0
          %395 = vmatpush.msra.mxu0 0.0
          %396 = vmatpush.msra.mxu0 0.0
          %397 = vmatpush.msra.mxu0 0.0
          %398 = vmatpush.msra.mxu0 0.0
          %399 = vmatpush.msra.mxu0 0.0
          %400 = vmatpush.msra.mxu0 0.0
          %401 = vmatpush.msra.mxu0 0.0
          %402 = vmatpush.msra.mxu0 0.0
          %403 = vmatpush.msra.mxu0 0.0
          %404 = vmatpush.msra.mxu0 0.0
          %405 = vmatpush.msra.mxu0 0.0
          %406 = vmatpush.msra.mxu0 %v389
          %407 = vmatpush.msra.mxu0 %v388
          %408 = vmatpush.msra.mxu0 %v387
          %409 = vmatpush.msra.mxu0 %v386
          %410 = vmatmul.f32.gmra.mxu0 %v392
          %v411 = vpop.f32.mrf.mxu0
          %v412 = vadd.f32 0.0, %v411
          %413 = vdwg.mxu0
          %v415 = vsel %vm390, %v385, 0
          %417 = vmatpush.msra.mxu0 0.0
          %418 = vmatpush.msra.mxu0 0.0
          %419 = vmatpush.msra.mxu0 0.0
          %420 = vmatpush.msra.mxu0 0.0
          %421 = vmatpush.msra.mxu0 0.0
          %422 = vmatpush.msra.mxu0 0.0
          %423 = vmatpush.msra.mxu0 0.0
          %424 = vmatpush.msra.mxu0 0.0
          %425 = vmatpush.msra.mxu0 0.0
          %426 = vmatpush.msra.mxu0 0.0
          %427 = vmatpush.msra.mxu0 0.0
          %428 = vmatpush.msra.mxu0 0.0
          %429 = vmatpush.msra.mxu0 %v389
          %430 = vmatpush.msra.mxu0 %v388
          %431 = vmatpush.msra.mxu0 %v387
          %432 = vmatpush.msra.mxu0 %v386
          %433 = vmatmul.f32.gmra.mxu0 %v415
          %v434 = vpop.f32.mrf.mxu0
          %v435 = vadd.f32 1e-05, %v434
          %436 = vdwg.mxu0
          %v437 = vrsqrt.pop %v435
          %v438 = vmul.f32 %v437, %v435
          %v439 = vmul.f32 %v438, %v437
          %v440 = vmul.f32 0.5, %v439
          %v441 = vsub.f32 1.5, %v440
          %v442 = vmul.f32 %v437, %v441
          %vm443 = vweird.f32 %v435
          %vm444 = vweird.f32 %v437
          %vm445 = vmor %vm443, %vm444
          %v446 = vsel %vm445, %v437, %v442
          %v447 = vld [vmem:[#allocation4] sm:$0x1]
          %v448 = vmul.f32 %v447, %v446
          %v449 = vld [vmem:[%s2] sm:$0x1]
          %v450 = vmul.f32 %v412, %v448
          %v451 = vsub.f32 %v449, %v450
          %v453 = vperm.slane %v451, 0
          %vm455 = vcmask 1040384
          %v456 = vsel %vm455, %v448, %v453
          %457 = vst [vmem:[%s255] sm:$0x3] %v456
        $region52: #{tpu_custom_call.1} parent=39 // pred_fallthru
          _
        %s458 = sand.u32 %s152, 1
        %s459 = scalar_lea.sflag [#allocation6], %s458
        %s460 = sand.u32 %s152, 1
        %s461 = smul.addr %s460, 2
        %s462 = scalar_lea.vmem [#allocation7], %s461
        // Predicated region
        $region53: #{tpu_custom_call.1} parent=39 // pred_check
          %p463 = pneg %p162
        $region54: #{tpu_custom_call.1} parent=39 // pred_check_branch
          %465 = sbr.rel (%p463) target = $region56
        $region55: #{tpu_custom_call.1} parent=39 // pred_region
          %467 = vsyncadd %s459, 0
          %s468 = smul.addr %s24, 2
          %s469 = scalar_lea.hbm %s5, %s468
          %s471 = sshll.u32 %s462, 4
          %s472 = int_to_ptr.vmem [resolvable:$true] %s471
          %s473 = sshll.u32 %s469, 4
          %s474 = int_to_ptr.hbm [resolvable:$true] %s473
          %476 = dma.vmem_to_hbm [thread:$0]  %s472, 32, %s474, %s459
        $region56: #{tpu_custom_call.1} parent=39 // pred_fallthru
          _
      $region40: #{tpu_custom_call.1} parent=5 // pred_fallthru
        _
      %p477 = scmp.le.s32.totalorder 2, %s15
      // Predicated region
      $region57: #{tpu_custom_call.1} parent=5 // pred_check
        %p478 = pneg %p477
      $region58: #{tpu_custom_call.1} parent=5 // pred_check_branch
        %480 = sbr.rel (%p478) target = $region60
      $region59: #{tpu_custom_call.1} parent=5 // pred_region
        %s481 = ssub.s32 %s15, 2
        // Predicated region
        $region61: #{tpu_custom_call.1} parent=59 // pred_check
          %p482 = pneg %p168
        $region62: #{tpu_custom_call.1} parent=59 // pred_check_branch
          %484 = sbr.rel (%p482) target = $region64
        $region63: #{tpu_custom_call.1} parent=59 // pred_region
          %s485 = sand.u32 %s153, 1
          %s486 = scalar_lea.sflag [#allocation6], %s485
          %s487 = sand.u32 %s153, 1
          %s488 = smul.addr %s487, 2
          %s489 = scalar_lea.vmem [#allocation7], %s488
          %491 = dma.done %s486, 32
        $region64: #{tpu_custom_call.1} parent=59 // pred_fallthru
          _
      $region60: #{tpu_custom_call.1} parent=5 // pred_fallthru
        _
    $region6: #{tpu_custom_call.1} parent=1 // loop_footer
      %s19 = sadd.s32 1, %s15
    $region7: #{tpu_custom_call.1} parent=1 // loop_footer_branch
      %14 = sbr.rel target = $region3
    $region8: #{tpu_custom_call.1} parent=1 // loop_exit
      _
    %492 = vsyncpa [#allocation5], 1
    %s493 = scalar_lea.sflag [#allocation5], 1
    %494 = vsyncpa %s493, 1
    %495 = vsyncpa [#allocation6], 1
    %s496 = scalar_lea.sflag [#allocation6], 1
    %497 = vsyncpa %s496, 1

</llo_original>
